<compile_context>
chip_gen: v7x
topology: tpu7x:2x2x1
jax: 0.10.0
libtpu: 0.0.40
codegen_flags: <defaults>
</compile_context>

<pallas_src>
import jax
import jax.numpy as jnp
from jax import lax
from jax.experimental import pallas as pl
from jax.experimental.pallas import tpu as pltpu


def classifier_kernel(x_ref, w_ref, b_ref, out_ref, pred_ref):
    # x_ref:    (TB, D)  VMEM   batch tile
    # w_ref:    (1, D)   VMEM   nn.Linear weight, (out_features, in_features) = (1, dim)
    # b_ref:    (1, 1)   SMEM   scalar bias
    # out_ref:  (1, TB)  lane-dense logits tile
    # pred_ref: (1, TB)  lane-dense sigmoid tile
    x = x_ref[...].astype(jnp.float32)
    w = w_ref[...].astype(jnp.float32)
    b = b_ref[0, 0]                                   # scalar read from SMEM

    # (1, D) . (TB, D) contracting on D -> (1, TB).  The result is produced lane-major,
    # so the stores below are unmasked full-width vst's instead of masked 1-lane stores.
    logits = lax.dot_general(
        w, x,
        dimension_numbers=(((1,), (1,)), ((), ())),
        preferred_element_type=jnp.float32,
    ) + b                                             # (1, TB), f32

    out_ref[...] = logits.astype(out_ref.dtype)

    # Exact sigmoid: exp on the EUP, exact divide (the approximate reciprocal failed the
    # parity check against the reference).  Epilogue is tiny either way.
    pred = 1.0 / (1.0 + jnp.exp(-logits))
    pred_ref[...] = pred.astype(pred_ref.dtype)


def classifier_forward(x, w, b, *, block_b=8192):
    """ClassifierModule.forward.

    x: (B, D); w: (1, D) (PyTorch nn.Linear weight layout); b: (1, 1).
    Returns (out, {'Predictions': sigmoid(out)}) with out of shape (B, 1).
    """
    B, D = x.shape
    assert w.shape == (1, D)
    assert b.shape == (1, 1)

    out_dtype = jnp.promote_types(x.dtype, w.dtype)
    itemsize = jnp.dtype(x.dtype).itemsize

    # ---- batch-tile selection -------------------------------------------------------
    # All tiling constraints are satisfied by making TB a multiple of 128 whenever we
    # actually tile (x tile sublane dim and lane-dense output tile lane dim).
    block_b = max(128, (block_b // 128) * 128)
    if B < 256:
        TB = B                                   # single full tile: full-dim blocks are legal
    else:
        # at least two tiles so the 'parallel' batch axis can shard across v7x's 2 TCs
        two_way = ((pl.cdiv(B, 2) + 127) // 128) * 128
        TB = min(block_b, two_way)
    grid = (pl.cdiv(B, TB),)

    # x tile double-buffered + two lane-dense output tiles double-buffered + weight + slack.
    vmem_needed = 2 * TB * D * itemsize + 4 * TB * jnp.dtype(out_dtype).itemsize + D * 4 + (2 << 20)
    vmem_limit = int(min(max(vmem_needed, 16 << 20), 48 << 20))   # v7x(64 MiB)-safe cap

    cost = pl.CostEstimate(
        flops=2 * B * D + 4 * B,
        transcendentals=B,
        bytes_accessed=B * D * itemsize + D * itemsize
        + 2 * B * jnp.dtype(out_dtype).itemsize,
    )

    out_row, pred_row = pl.pallas_call(
        classifier_kernel,
        out_shape=(
            jax.ShapeDtypeStruct((1, B), out_dtype),   # logits ('out'), lane-dense
            jax.ShapeDtypeStruct((1, B), out_dtype),   # end_points['Predictions'], lane-dense
        ),
        grid_spec=pltpu.PrefetchScalarGridSpec(
            num_scalar_prefetch=0,
            grid=grid,
            in_specs=[
                pl.BlockSpec((TB, D), lambda i: (i, 0)),               # x, tiled over batch
                pl.BlockSpec((1, D), lambda i: (0, 0)),                # weight row, resident
                pl.BlockSpec(memory_space=pltpu.MemorySpace.SMEM),     # scalar bias in SMEM
            ],
            out_specs=[
                pl.BlockSpec((1, TB), lambda i: (0, i)),
                pl.BlockSpec((1, TB), lambda i: (0, i)),
            ],
        ),
        compiler_params=pltpu.CompilerParams(
            dimension_semantics=("parallel",),     # independent batch tiles -> megacore
            vmem_limit_bytes=vmem_limit,
        ),
        cost_estimate=cost,
    )(x, w, b)

    # Layout plumbing only: present the module's (B, 1) output shape.
    out = out_row.reshape(B, 1)
    preds = pred_row.reshape(B, 1)
    return out, {"Predictions": preds}


if __name__ == "__main__":
    # flags['hd'] == 1  ->  dim = 128
    dim = 128
    batch = 512          # small, but exercises the two-tile batch grid (TB=256, grid=(2,))

    key = jax.random.PRNGKey(0)
    kx, kw, kb = jax.random.split(key, 3)

    # Deterministic param init (mimics nn.Linear's uniform(-1/sqrt(dim), 1/sqrt(dim)))
    bound = 1.0 / jnp.sqrt(jnp.float32(dim))
    w = jax.random.uniform(kw, (1, dim), jnp.float32, -bound, bound)   # (out, in) = (1, dim)
    b = jax.random.uniform(kb, (1, 1), jnp.float32, -bound, bound)
    x = jax.random.normal(kx, (batch, dim), jnp.float32)

    out, end_points = classifier_forward(x, w, b)
    preds = end_points["Predictions"]
    jax.block_until_ready((out, preds))

    # Sanity check against a plain-JAX reference (pure f32 VPU math, no matmul precision games)
    ref_out = jnp.sum(x * w, axis=-1, keepdims=True) + b[0, 0]
    ref_pred = 1.0 / (1.0 + jnp.exp(-ref_out))

    assert out.shape == (batch, 1) and preds.shape == (batch, 1), "shape mismatch"
    assert jnp.allclose(out, ref_out, atol=1e-4, rtol=1e-4), "logits mismatch"
    assert jnp.allclose(preds, ref_pred, atol=1e-4, rtol=1e-4), "sigmoid mismatch"

    print("KERNEL_OK")
</pallas_src>

<mosaic_0001>
module attributes {stable_mosaic.version = 11 : i64} {
  func.func @classifier_kernel(%arg0: i32, %arg1: memref<256x128xf32, #tpu.memory_space<vmem>>, %arg2: memref<1x128xf32, #tpu.memory_space<vmem>>, %arg3: memref<1x1xf32, #tpu.memory_space<smem>>, %arg4: memref<1x256xf32, #tpu.memory_space<vmem>>, %arg5: memref<1x256xf32, #tpu.memory_space<vmem>>) attributes {dimension_semantics = [#tpu.dimension_semantics<parallel>], iteration_bounds = array<i64: 2>, scalar_prefetch = 0 : i64, scratch_operands = 0 : i64, tpu.core_type = #tpu.core_type<tc>, window_params = [{transform_indices = @transform_0, window_bounds = array<i64: 256, 128>}, {pipeline_mode = #tpu.pipeline_mode<synchronous>, transform_indices = @transform_1, window_bounds = array<i64: 1, 128>}, {transform_indices = @transform_2, window_bounds = array<i64: 1, 1>}, {transform_indices = @transform_3, window_bounds = array<i64: 1, 256>}, {transform_indices = @transform_4, window_bounds = array<i64: 1, 256>}]} {
    %c0 = arith.constant 0 : index
    %c0_0 = arith.constant 0 : index
    %0 = vector.load %arg1[%c0, %c0_0] : memref<256x128xf32, #tpu.memory_space<vmem>>, vector<256x128xf32>
    %c0_1 = arith.constant 0 : index
    %c0_2 = arith.constant 0 : index
    %1 = vector.load %arg2[%c0_1, %c0_2] : memref<1x128xf32, #tpu.memory_space<vmem>>, vector<1x128xf32>
    %c0_3 = arith.constant 0 : index
    %c0_4 = arith.constant 0 : index
    %2 = memref.load %arg3[%c0_3, %c0_4] : memref<1x1xf32, #tpu.memory_space<smem>>
    %cst = arith.constant dense<0.000000e+00> : vector<1x256xf32>
    %3 = tpu.matmul %1, %0, %cst {dimension_numbers = #tpu.dot_dimension_numbers<[1], [1], [0], [0], [0, 0, 1, 0], [], []>} : vector<1x128xf32>, vector<256x128xf32>, vector<1x256xf32> -> vector<1x256xf32>
    %4 = vector.broadcast %2 : f32 to vector<1x256xf32>
    %5 = arith.addf %3, %4 : vector<1x256xf32>
    %c0_5 = arith.constant 0 : index
    %c0_6 = arith.constant 0 : index
    %6 = vector.load %arg4[%c0_5, %c0_6] : memref<1x256xf32, #tpu.memory_space<vmem>>, vector<1x256xf32>
    tpu.vector_store %arg4[%c0_5, %c0_6], %5 {strides = array<i32>} : memref<1x256xf32, #tpu.memory_space<vmem>>, vector<1x256xf32>,
    %cst_7 = arith.constant 0.000000e+00 : f32
    %7 = vector.broadcast %cst_7 : f32 to vector<1x256xf32>
    %8 = arith.subf %7, %5 : vector<1x256xf32>
    %9 = math.exp %8 : vector<1x256xf32>
    %cst_8 = arith.constant 1.000000e+00 : f32
    %10 = vector.broadcast %cst_8 : f32 to vector<1x256xf32>
    %11 = arith.addf %10, %9 : vector<1x256xf32>
    %cst_9 = arith.constant 1.000000e+00 : f32
    %12 = vector.broadcast %cst_9 : f32 to vector<1x256xf32>
    %13 = arith.divf %12, %11 : vector<1x256xf32>
    %c0_10 = arith.constant 0 : index
    %c0_11 = arith.constant 0 : index
    %14 = vector.load %arg5[%c0_10, %c0_11] : memref<1x256xf32, #tpu.memory_space<vmem>>, vector<1x256xf32>
    tpu.vector_store %arg5[%c0_10, %c0_11], %13 {strides = array<i32>} : memref<1x256xf32, #tpu.memory_space<vmem>>, vector<1x256xf32>,
    return
  }
  func.func @transform_0(%arg0: i32) -> (i32, i32) {
    %c0_i32 = arith.constant 0 : i32
    %c0_i32_0 = arith.constant 0 : i32
    return %arg0, %c0_i32 : i32, i32
  }
  func.func @transform_1(%arg0: i32) -> (i32, i32) {
    %c0_i32 = arith.constant 0 : i32
    %c0_i32_0 = arith.constant 0 : i32
    %c0_i32_1 = arith.constant 0 : i32
    return %c0_i32, %c0_i32_0 : i32, i32
  }
  func.func @transform_2(%arg0: i32) -> (i32, i32) {
    %c0_i32 = arith.constant 0 : i32
    %c0_i32_0 = arith.constant 0 : i32
    %c0_i32_1 = arith.constant 0 : i32
    return %c0_i32, %c0_i32_0 : i32, i32
  }
  func.func @transform_3(%arg0: i32) -> (i32, i32) {
    %c0_i32 = arith.constant 0 : i32
    %c0_i32_0 = arith.constant 0 : i32
    return %c0_i32, %arg0 : i32, i32
  }
  func.func @transform_4(%arg0: i32) -> (i32, i32) {
    %c0_i32 = arith.constant 0 : i32
    %c0_i32_0 = arith.constant 0 : i32
    return %c0_i32, %arg0 : i32, i32
  }
}

</mosaic_0001>

<llo_original>
// kernel: tpu_custom_call.1
$region0: #{tpu_custom_call.1}
  #allocation0 [shape = 'u32[]', space=smem, size = 0x4, offset = 0x4, fixed_abs, tag = 'smem constant byte address 0x4 - core index']
  #allocation1 [shape = 'u32[144,128]{1,0:T(1,128)}', space=vmem, size = 0x12000, scoped, tag = 'internal scratch']
  #allocation2 [shape = 'f32[1,1]{1,0:T(1,128)S(6)}', space=smem, size = 0x200, scoped, tag = 'scoped memory for tpu_custom_call.1']
  %s0 = inlined_call_operand.hbm [shape: f32[512,128], index: 0, kind: input, shape index: {}]
  %s1 = inlined_call_operand.vmem [shape: f32[1,128], index: 1, kind: input, shape index: {}]
  %s2 = inlined_call_operand.<no memory space> [shape: f32[1,1], index: 2, kind: input, shape index: {}]
  %s3 = inlined_call_operand.hbm [shape: f32[1,512], index: 3, kind: output, shape index: {0}]
  %s4 = inlined_call_operand.hbm [shape: f32[1,512], index: 4, kind: output, shape index: {1}]
  %5 = xla_tuple %s3, %s4
  %s6 = sld [smem:[#allocation0]]
  $region57: #{tpu_custom_call.1} parent=0
    _
  %s8 = ssub.s32 1, %s6
  %s9 = scalar_select 0, %s8, %s6
  %10 = sst [smem:[#allocation2]] %s2
  $region1: #{tpu_custom_call.1} parent=0
    #allocation3 [shape = 'u8[262144]{0}', space=vmem, size = 0x40000, scoped, tag = 'input window, operand 0']
    #allocation4 [shape = 's32[2]{0}', space=sflag, size = 0x8, scoped, tag = 'scoped memory for tpu_custom_call.1']
    #allocation5 [shape = 's32[2]{0}', space=sflag, size = 0x8, scoped, tag = 'scoped memory for tpu_custom_call.1']
    #allocation6 [shape = 'u8[2048]{0}', space=vmem, size = 0x800, scoped, tag = 'output window, operand 0']
    #allocation7 [shape = 'u8[2048]{0}', space=vmem, size = 0x800, scoped, tag = 'output window, operand 1']
    #allocation8 [shape = 's32[2]{0}', space=sflag, size = 0x8, scoped, tag = 'scoped memory for tpu_custom_call.1']
    %11 = vsyncpa [#allocation4], 0
    %s12 = scalar_lea.sflag [#allocation4], 1
    %13 = vsyncpa %s12, 0
    %14 = vsyncpa [#allocation5], 0
    %s15 = scalar_lea.sflag [#allocation5], 1
    %16 = vsyncpa %s15, 0
    %17 = vsyncpa [#allocation8], 0
    %s18 = scalar_lea.sflag [#allocation8], 1
    %19 = vsyncpa %s18, 0
    loop: start=0, step=1, limit=4
    $region2: #{tpu_custom_call.1} parent=1 // loop_pre_header
      _
    $region3: #{tpu_custom_call.1} parent=1 // loop_header
      %s21 = sphi 0, %s25
      %p22 = scmp.ge.s32.totalorder %s21, 4
      %s31 = sphi 0, %s33
      %s34 = sphi 0, %s31
      %s35 = sphi 0, %s34
      %s51 = sphi 0, %s35
      %s55 = sphi 0, %s55
      %s57 = sphi 0, %s55
      %s58 = sphi 0, %s57
      %s72 = sphi 0, %s58
      %s76 = sphi 0, %s76
      %s78 = sphi 0, %s76
      %s79 = sphi 0, %s78
      %s93 = sphi 0, %s79
      %s99 = sphi 0, %s101
      %s102 = sphi 0, %s99
      %s103 = sphi 0, %s102
      %s119 = sphi 0, %s103
      %s125 = sphi 0, %s127
      %s128 = sphi 0, %s125
      %s129 = sphi 0, %s128
      %s145 = sphi 0, %s129
    $region4: #{tpu_custom_call.1} parent=1 // loop_header_branch
      %24 = sbr.rel (%p22) target = $region8
    $region5: #{tpu_custom_call.1} parent=1 // loop_body
      %s26 = ssub.s32 %s21, 1
      %s27 = ssub.s32 %s21, 2
      %s28 = sadd.s32 %s21, 1
      %s29 = ssub.s32 %s21, %s28
      %p30 = scmp.eq.s32.totalorder %s29, 0
      %s32 = sadd.s32 %s31, 1
      %s33 = scalar_select %p30, %s31, %s32
      %p36 = pneg %p30
      %p37 = scmp.eq.s32.totalorder %s21, 1
      %p38 = por %p36, %p37
      %p39 = scmp.ne.s32.totalorder %s31, %s34
      %p40 = scmp.eq.s32.totalorder %s21, 0
      %p41 = por %p39, %p40
      %p42 = scmp.ne.s32.totalorder %s31, %s34
      %p43 = scmp.eq.s32.totalorder %s26, 1
      %p44 = por %p42, %p43
      %p45 = scmp.ne.s32.totalorder %s34, %s35
      %p46 = scmp.eq.s32.totalorder %s26, 0
      %p47 = por %p45, %p46
      %p48 = scmp.ne.s32.totalorder %s34, %s35
      %p49 = scmp.eq.s32.totalorder %s27, 1
      %p50 = por %p48, %p49
      %p52 = scmp.ne.s32.totalorder %s35, %s51
      %p53 = scmp.eq.s32.totalorder %s27, 0
      %p54 = por %p52, %p53
      %s56 = sadd.s32 %s55, 1
      %p59 = scmp.eq.s32.totalorder %s21, 1
      %p60 = scmp.ne.s32.totalorder %s55, %s57
      %p61 = scmp.eq.s32.totalorder %s21, 0
      %p62 = por %p60, %p61
      %p63 = scmp.ne.s32.totalorder %s55, %s57
      %p64 = scmp.eq.s32.totalorder %s26, 1
      %p65 = por %p63, %p64
      %p66 = scmp.ne.s32.totalorder %s57, %s58
      %p67 = scmp.eq.s32.totalorder %s26, 0
      %p68 = por %p66, %p67
      %p69 = scmp.ne.s32.totalorder %s57, %s58
      %p70 = scmp.eq.s32.totalorder %s27, 1
      %p71 = por %p69, %p70
      %p73 = scmp.ne.s32.totalorder %s58, %s72
      %p74 = scmp.eq.s32.totalorder %s27, 0
      %p75 = por %p73, %p74
      %s77 = sadd.s32 %s76, 1
      %p80 = scmp.eq.s32.totalorder %s21, 1
      %p81 = scmp.ne.s32.totalorder %s76, %s78
      %p82 = scmp.eq.s32.totalorder %s21, 0
      %p83 = por %p81, %p82
      %p84 = scmp.ne.s32.totalorder %s76, %s78
      %p85 = scmp.eq.s32.totalorder %s26, 1
      %p86 = por %p84, %p85
      %p87 = scmp.ne.s32.totalorder %s78, %s79
      %p88 = scmp.eq.s32.totalorder %s26, 0
      %p89 = por %p87, %p88
      %p90 = scmp.ne.s32.totalorder %s78, %s79
      %p91 = scmp.eq.s32.totalorder %s27, 1
      %p92 = por %p90, %p91
      %p94 = scmp.ne.s32.totalorder %s79, %s93
      %p95 = scmp.eq.s32.totalorder %s27, 0
      %p96 = por %p94, %p95
      %s97 = ssub.s32 %s21, %s28
      %p98 = scmp.eq.s32.totalorder %s97, 0
      %s100 = sadd.s32 %s99, 1
      %s101 = scalar_select %p98, %s99, %s100
      %p104 = pneg %p98
      %p105 = scmp.eq.s32.totalorder %s21, 1
      %p106 = por %p104, %p105
      %p107 = scmp.ne.s32.totalorder %s99, %s102
      %p108 = scmp.eq.s32.totalorder %s21, 0
      %p109 = por %p107, %p108
      %p110 = scmp.ne.s32.totalorder %s99, %s102
      %p111 = scmp.eq.s32.totalorder %s26, 1
      %p112 = por %p110, %p111
      %p113 = scmp.ne.s32.totalorder %s102, %s103
      %p114 = scmp.eq.s32.totalorder %s26, 0
      %p115 = por %p113, %p114
      %p116 = scmp.ne.s32.totalorder %s102, %s103
      %p117 = scmp.eq.s32.totalorder %s27, 1
      %p118 = por %p116, %p117
      %p120 = scmp.ne.s32.totalorder %s103, %s119
      %p121 = scmp.eq.s32.totalorder %s27, 0
      %p122 = por %p120, %p121
      %s123 = ssub.s32 %s21, %s28
      %p124 = scmp.eq.s32.totalorder %s123, 0
      %s126 = sadd.s32 %s125, 1
      %s127 = scalar_select %p124, %s125, %s126
      %p130 = pneg %p124
      %p131 = scmp.eq.s32.totalorder %s21, 1
      %p132 = por %p130, %p131
      %p133 = scmp.ne.s32.totalorder %s125, %s128
      %p134 = scmp.eq.s32.totalorder %s21, 0
      %p135 = por %p133, %p134
      %p136 = scmp.ne.s32.totalorder %s125, %s128
      %p137 = scmp.eq.s32.totalorder %s26, 1
      %p138 = por %p136, %p137
      %p139 = scmp.ne.s32.totalorder %s128, %s129
      %p140 = scmp.eq.s32.totalorder %s26, 0
      %p141 = por %p139, %p140
      %p142 = scmp.ne.s32.totalorder %s128, %s129
      %p143 = scmp.eq.s32.totalorder %s27, 1
      %p144 = por %p142, %p143
      %p146 = scmp.ne.s32.totalorder %s129, %s145
      %p147 = scmp.eq.s32.totalorder %s27, 0
      %p148 = por %p146, %p147
      %p149 = scmp.le.s32.totalorder 1, %s21
      %p150 = scmp.lt.s32.totalorder %s21, 3
      %p151 = pnand %p149, %p150
      %p152 = pneg %p151
      // Predicated region
      $region9: #{tpu_custom_call.1} parent=5 // pred_check
        _
      $region10: #{tpu_custom_call.1} parent=5 // pred_check_branch
        %154 = sbr.rel (%p151) target = $region12
      $region11: #{tpu_custom_call.1} parent=5 // pred_region
        %s155 = ssub.s32 %s21, 1
        // Predicated region
        $region13: #{tpu_custom_call.1} parent=11 // pred_check
          %p156 = pneg %p68
        $region14: #{tpu_custom_call.1} parent=11 // pred_check_branch
          %158 = sbr.rel (%p156) target = $region16
        $region15: #{tpu_custom_call.1} parent=11 // pred_region
          _
        $region16: #{tpu_custom_call.1} parent=11 // pred_fallthru
          _
        // Predicated region
        $region17: #{tpu_custom_call.1} parent=11 // pred_check
          %p159 = pneg %p89
        $region18: #{tpu_custom_call.1} parent=11 // pred_check_branch
          %161 = sbr.rel (%p159) target = $region20
        $region19: #{tpu_custom_call.1} parent=11 // pred_region
          _
        $region20: #{tpu_custom_call.1} parent=11 // pred_fallthru
          _
      $region12: #{tpu_custom_call.1} parent=5 // pred_fallthru
        _
      %p162 = scmp.lt.s32.totalorder %s21, 2
      // Predicated region
      $region21: #{tpu_custom_call.1} parent=5 // pred_check
        %p163 = pneg %p162
      $region22: #{tpu_custom_call.1} parent=5 // pred_check_branch
        %165 = sbr.rel (%p163) target = $region24
      $region23: #{tpu_custom_call.1} parent=5 // pred_region
        // Predicated region
        $region25: #{tpu_custom_call.1} parent=23 // pred_check
          %p166 = pneg %p41
        $region26: #{tpu_custom_call.1} parent=23 // pred_check_branch
          %168 = sbr.rel (%p166) target = $region28
        $region27: #{tpu_custom_call.1} parent=23 // pred_region
          %s169 = sand.u32 %s31, 1
          %s170 = scalar_lea.sflag [#allocation4], %s169
          %s171 = sand.u32 %s31, 1
          %s172 = smul.addr %s171, 256
          %s173 = scalar_lea.vmem [#allocation3], %s172
          %s174 = smul.u32 32, %s21
          %s176 = ssub.s32 4096, 4096
          %177 = vsyncadd %s170, %s176
          %s178 = smul.addr %s174, 128
          %s179 = scalar_lea.hbm %s0, %s178
          %s180 = sshll.u32 %s173, 4
          %s181 = int_to_ptr.vmem [resolvable:$true] %s180
          %186 = dma.hbm_to_vmem [thread:$0]  %s179, 4096, %s181, %s170, 128, 128, 8
        $region28: #{tpu_custom_call.1} parent=23 // pred_fallthru
          _
      $region24: #{tpu_custom_call.1} parent=5 // pred_fallthru
        _
      %p187 = scmp.le.s32.totalorder 1, %s21
      %p188 = scmp.lt.s32.totalorder %s21, 3
      %p189 = pnand %p187, %p188
      %p190 = pneg %p189
      // Predicated region
      $region29: #{tpu_custom_call.1} parent=5 // pred_check
        _
      $region30: #{tpu_custom_call.1} parent=5 // pred_check_branch
        %192 = sbr.rel (%p189) target = $region32
      $region31: #{tpu_custom_call.1} parent=5 // pred_region
        %s193 = ssub.s32 %s21, 1
        %s194 = sand.u32 %s34, 1
        %s195 = scalar_lea.sflag [#allocation4], %s194
        %s196 = sand.u32 %s34, 1
        %s197 = smul.addr %s196, 256
        %s198 = scalar_lea.vmem [#allocation3], %s197
        // Predicated region
        $region33: #{tpu_custom_call.1} parent=31 // pred_check
          %p199 = pneg %p47
        $region34: #{tpu_custom_call.1} parent=31 // pred_check_branch
          %201 = sbr.rel (%p199) target = $region36
        $region35: #{tpu_custom_call.1} parent=31 // pred_region
          %202 = dma.done %s195, 4096
        $region36: #{tpu_custom_call.1} parent=31 // pred_fallthru
          _
        %s203 = sand.u32 %s34, 1
        %s204 = scalar_lea.sflag [#allocation4], %s203
        %s205 = sand.u32 %s34, 1
        %s206 = smul.addr %s205, 256
        %s207 = scalar_lea.vmem [#allocation3], %s206
        %p208 = pneg %p47
        %p209 = pneg %p44
        %p210 = pneg %p68
        %p211 = pneg %p65
        %p212 = pneg %p89
        %p213 = pneg %p86
        %p214 = pneg %p115
        %p215 = pneg %p112
        %s216 = sand.u32 %s102, 1
        %s217 = scalar_lea.sflag [#allocation5], %s216
        %s218 = sand.u32 %s102, 1
        %s219 = smul.addr %s218, 2
        %s220 = scalar_lea.vmem [#allocation6], %s219
        %p221 = pneg %p141
        %p222 = pneg %p138
        %s223 = sand.u32 %s128, 1
        %s224 = scalar_lea.sflag [#allocation8], %s223
        %s225 = sand.u32 %s128, 1
        %s226 = smul.addr %s225, 2
        %s227 = scalar_lea.vmem [#allocation7], %s226
        %s228 = smul.u32 32, %s26
        %s229 = smul.u32 2, %s26
        %s230 = smul.u32 2, %s26
        %v231 = vld [vmem:[%s198] sm:$0xff]
        %v232 = vld [vmem:[%s198 + $0x8] sm:$0xff]
        %v233 = vld [vmem:[%s198 + $0x10] sm:$0xff]
        %v234 = vld [vmem:[%s198 + $0x18] sm:$0xff]
        %v235 = vld [vmem:[%s198 + $0x20] sm:$0xff]
        %v236 = vld [vmem:[%s198 + $0x28] sm:$0xff]
        %v237 = vld [vmem:[%s198 + $0x30] sm:$0xff]
        %v238 = vld [vmem:[%s198 + $0x38] sm:$0xff]
        %v239 = vld [vmem:[%s198 + $0x40] sm:$0xff]
        %v240 = vld [vmem:[%s198 + $0x48] sm:$0xff]
        %v241 = vld [vmem:[%s198 + $0x50] sm:$0xff]
        %v242 = vld [vmem:[%s198 + $0x58] sm:$0xff]
        %v243 = vld [vmem:[%s198 + $0x60] sm:$0xff]
        %v244 = vld [vmem:[%s198 + $0x68] sm:$0xff]
        %v245 = vld [vmem:[%s198 + $0x70] sm:$0xff]
        %v246 = vld [vmem:[%s198 + $0x78] sm:$0xff]
        %v247 = vld [vmem:[%s198 + $0x80] sm:$0xff]
        %v248 = vld [vmem:[%s198 + $0x88] sm:$0xff]
        %v249 = vld [vmem:[%s198 + $0x90] sm:$0xff]
        %v250 = vld [vmem:[%s198 + $0x98] sm:$0xff]
        %v251 = vld [vmem:[%s198 + $0xa0] sm:$0xff]
        %v252 = vld [vmem:[%s198 + $0xa8] sm:$0xff]
        %v253 = vld [vmem:[%s198 + $0xb0] sm:$0xff]
        %v254 = vld [vmem:[%s198 + $0xb8] sm:$0xff]
        %v255 = vld [vmem:[%s198 + $0xc0] sm:$0xff]
        %v256 = vld [vmem:[%s198 + $0xc8] sm:$0xff]
        %v257 = vld [vmem:[%s198 + $0xd0] sm:$0xff]
        %v258 = vld [vmem:[%s198 + $0xd8] sm:$0xff]
        %v259 = vld [vmem:[%s198 + $0xe0] sm:$0xff]
        %v260 = vld [vmem:[%s198 + $0xe8] sm:$0xff]
        %v261 = vld [vmem:[%s198 + $0xf0] sm:$0xff]
        %v262 = vld [vmem:[%s198 + $0xf8] sm:$0xff]
        %v263 = vld [vmem:[%s1] sm:$0x1]
        %s264 = sld [smem:[#allocation2]]
        %v265 = vstv %s264
        %266 = vmatprep.subr.mxu0 0.0
        %267 = vmatpush1.xpose.msra.mxu0 %v231
        %268 = vmatprep.subr.mxu0 0.0
        %269 = vmatpush1.xpose.msra.mxu0 %v232
        %270 = vmatprep.subr.mxu0 0.0
        %271 = vmatpush1.xpose.msra.mxu0 %v233
        %272 = vmatprep.subr.mxu0 0.0
        %273 = vmatpush1.xpose.msra.mxu0 %v234
        %274 = vmatprep.subr.mxu0 0.0
        %275 = vmatpush1.xpose.msra.mxu0 %v235
        %276 = vmatprep.subr.mxu0 0.0
        %277 = vmatpush1.xpose.msra.mxu0 %v236
        %278 = vmatprep.subr.mxu0 0.0
        %279 = vmatpush1.xpose.msra.mxu0 %v237
        %280 = vmatprep.subr.mxu0 0.0
        %281 = vmatpush1.xpose.msra.mxu0 %v238
        %282 = vmatprep.subr.mxu0 0.0
        %283 = vmatpush1.xpose.msra.mxu0 %v239
        %284 = vmatprep.subr.mxu0 0.0
        %285 = vmatpush1.xpose.msra.mxu0 %v240
        %286 = vmatprep.subr.mxu0 0.0
        %287 = vmatpush1.xpose.msra.mxu0 %v241
        %288 = vmatprep.subr.mxu0 0.0
        %289 = vmatpush1.xpose.msra.mxu0 %v242
        %290 = vmatprep.subr.mxu0 0.0
        %291 = vmatpush1.xpose.msra.mxu0 %v243
        %292 = vmatprep.subr.mxu0 0.0
        %293 = vmatpush1.xpose.msra.mxu0 %v244
        %294 = vmatprep.subr.mxu0 0.0
        %295 = vmatpush1.xpose.msra.mxu0 %v245
        %296 = vmatprep.subr.mxu0 0.0
        %297 = vmatpush1.xpose.msra.mxu0 %v246
        %298 = vmatprep.subr.mxu0 0.0
        %299 = vmatpush1.xpose.msra.mxu0 %v247
        %300 = vmatprep.subr.mxu0 0.0
        %301 = vmatpush1.xpose.msra.mxu0 %v248
        %302 = vmatprep.subr.mxu0 0.0
        %303 = vmatpush1.xpose.msra.mxu0 %v249
        %304 = vmatprep.subr.mxu0 0.0
        %305 = vmatpush1.xpose.msra.mxu0 %v250
        %306 = vmatprep.subr.mxu0 0.0
        %307 = vmatpush1.xpose.msra.mxu0 %v251
        %308 = vmatprep.subr.mxu0 0.0
        %309 = vmatpush1.xpose.msra.mxu0 %v252
        %310 = vmatprep.subr.mxu0 0.0
        %311 = vmatpush1.xpose.msra.mxu0 %v253
        %312 = vmatprep.subr.mxu0 0.0
        %313 = vmatpush1.xpose.msra.mxu0 %v254
        %314 = vmatprep.subr.mxu0 0.0
        %315 = vmatpush1.xpose.msra.mxu0 %v255
        %316 = vmatprep.subr.mxu0 0.0
        %317 = vmatpush1.xpose.msra.mxu0 %v256
        %318 = vmatprep.subr.mxu0 0.0
        %319 = vmatpush1.xpose.msra.mxu0 %v257
        %320 = vmatprep.subr.mxu0 0.0
        %321 = vmatpush1.xpose.msra.mxu0 %v258
        %322 = vmatprep.subr.mxu0 0.0
        %323 = vmatpush1.xpose.msra.mxu0 %v259
        %324 = vmatprep.subr.mxu0 0.0
        %325 = vmatpush1.xpose.msra.mxu0 %v260
        %326 = vmatprep.subr.mxu0 0.0
        %327 = vmatpush1.xpose.msra.mxu0 %v261
        %328 = vmatprep.subr.mxu0 0.0
        %329 = vmatpush1.xpose.msra.mxu0 %v262
        %330 = vmatprep.mubr.f32.mxu0 0.0
        %331 = vmatmul.mubr.f32.gmra.mrb[0].mxu0 %v263
        %v332 = vpop.f32.mrb[0].mxu0
        %v333 = vadd.f32 %v265, %v332
        %v334 = vpop.f32.mrb[0].mxu0
        %v335 = vadd.f32 %v265, %v334
        %336 = vdwg.mxu0
        %v339 = vcombine.low %v333, %v335
        %v341 = vunpack.c.l.s4 1966171168
        %v342 = vunpack.c.0.s8 %v341
        %v343 = vlaneseq
        %v344 = vshrl.u32 %v343, 7
        %v345 = vsub.s32 %v342, %v344
        %v346 = vrot.slane %v339, %v345
        %v348 = vunpack.c.l.s4 1966171168
        %v349 = vunpack.c.0.s8 %v348
        %v350 = vlaneseq
        %v351 = vshrl.u32 %v350, 7
        %v352 = vsub.s32 %v349, %v351
        %v353 = vrot.slane %v346, %v352
        %v355 = vlaneseq
        %vm356 = vcmp.ge.s32.totalorder %v355, 0
        %vm357 = vcmp.lt.s32.totalorder %v355, 256
        %vm358 = vmand %vm356, %vm357
        %359 = vst.msk [vmem:[%s220] sm:$0x3] %vm358, %v353
        %v360 = vsub.f32 0.0, %v333
        %v361 = vsub.f32 0.0, %v335
        %v362 = vmul.f32 %v360, 1.442695
        %v363 = vpow.pop %v362
        %v364 = vmul.f32 %v361, 1.442695
        %v365 = vpow.pop %v364
        %v366 = vadd.f32 %v363, 1.0
        %v367 = vadd.f32 %v365, 1.0
        %v368 = vrcp.pop %v366
        %v369 = vmul.f32 1.0, %v368
        %v370 = vrcp.pop %v367
        %v371 = vmul.f32 1.0, %v370
        %v374 = vcombine.low %v369, %v371
        %v376 = vunpack.c.l.s4 1966171168
        %v377 = vunpack.c.0.s8 %v376
        %v378 = vlaneseq
        %v379 = vshrl.u32 %v378, 7
        %v380 = vsub.s32 %v377, %v379
        %v381 = vrot.slane %v374, %v380
        %v383 = vunpack.c.l.s4 1966171168
        %v384 = vunpack.c.0.s8 %v383
        %v385 = vlaneseq
        %v386 = vshrl.u32 %v385, 7
        %v387 = vsub.s32 %v384, %v386
        %v388 = vrot.slane %v381, %v387
        %390 = vst.msk [vmem:[%s227] sm:$0x3] %vm358, %v388
        %s391 = sand.u32 %s102, 1
        %s392 = scalar_lea.sflag [#allocation5], %s391
        %s393 = sand.u32 %s102, 1
        %s394 = smul.addr %s393, 2
        %s395 = scalar_lea.vmem [#allocation6], %s394
        %s396 = sand.u32 %s128, 1
        %s397 = scalar_lea.sflag [#allocation8], %s396
        %s398 = sand.u32 %s128, 1
        %s399 = smul.addr %s398, 2
        %s400 = scalar_lea.vmem [#allocation7], %s399
        // Predicated region
        $region37: #{tpu_custom_call.1} parent=31 // pred_check
          %p401 = pneg %p112
        $region38: #{tpu_custom_call.1} parent=31 // pred_check_branch
          %403 = sbr.rel (%p401) target = $region40
        $region39: #{tpu_custom_call.1} parent=31 // pred_region
          %s404 = smul.u32 2, %s26
          %s406 = ssub.s32 32, 32
          %407 = vsyncadd %s392, %s406
          %s408 = smul.addr %s404, 16
          %s409 = scalar_lea.hbm %s3, %s408
          %s411 = sshll.u32 %s395, 4
          %s412 = int_to_ptr.vmem [resolvable:$true] %s411
          %414 = dma.vmem_to_hbm [thread:$0]  %s412, 32, %s409, %s392
        $region40: #{tpu_custom_call.1} parent=31 // pred_fallthru
          _
        // Predicated region
        $region41: #{tpu_custom_call.1} parent=31 // pred_check
          %p415 = pneg %p138
        $region42: #{tpu_custom_call.1} parent=31 // pred_check_branch
          %417 = sbr.rel (%p415) target = $region44
        $region43: #{tpu_custom_call.1} parent=31 // pred_region
          %s418 = smul.u32 2, %s26
          %s420 = ssub.s32 32, 32
          %421 = vsyncadd %s397, %s420
          %s422 = smul.addr %s418, 16
          %s423 = scalar_lea.hbm %s4, %s422
          %s425 = sshll.u32 %s400, 4
          %s426 = int_to_ptr.vmem [resolvable:$true] %s425
          %428 = dma.vmem_to_hbm [thread:$0]  %s426, 32, %s423, %s397
        $region44: #{tpu_custom_call.1} parent=31 // pred_fallthru
          _
      $region32: #{tpu_custom_call.1} parent=5 // pred_fallthru
        _
      %p429 = scmp.le.s32.totalorder 2, %s21
      // Predicated region
      $region45: #{tpu_custom_call.1} parent=5 // pred_check
        %p430 = pneg %p429
      $region46: #{tpu_custom_call.1} parent=5 // pred_check_branch
        %432 = sbr.rel (%p430) target = $region48
      $region47: #{tpu_custom_call.1} parent=5 // pred_region
        %s433 = ssub.s32 %s21, 2
        // Predicated region
        $region49: #{tpu_custom_call.1} parent=47 // pred_check
          %p434 = pneg %p118
        $region50: #{tpu_custom_call.1} parent=47 // pred_check_branch
          %436 = sbr.rel (%p434) target = $region52
        $region51: #{tpu_custom_call.1} parent=47 // pred_region
          %s437 = sand.u32 %s103, 1
          %s438 = scalar_lea.sflag [#allocation5], %s437
          %s439 = sand.u32 %s103, 1
          %s440 = smul.addr %s439, 2
          %s441 = scalar_lea.vmem [#allocation6], %s440
          %442 = dma.done %s438, 32
        $region52: #{tpu_custom_call.1} parent=47 // pred_fallthru
          _
        // Predicated region
        $region53: #{tpu_custom_call.1} parent=47 // pred_check
          %p443 = pneg %p144
        $region54: #{tpu_custom_call.1} parent=47 // pred_check_branch
          %445 = sbr.rel (%p443) target = $region56
        $region55: #{tpu_custom_call.1} parent=47 // pred_region
          %s446 = sand.u32 %s129, 1
          %s447 = scalar_lea.sflag [#allocation8], %s446
          %s448 = sand.u32 %s129, 1
          %s449 = smul.addr %s448, 2
          %s450 = scalar_lea.vmem [#allocation7], %s449
          %451 = dma.done %s447, 32
        $region56: #{tpu_custom_call.1} parent=47 // pred_fallthru
          _
      $region48: #{tpu_custom_call.1} parent=5 // pred_fallthru
        _
    $region6: #{tpu_custom_call.1} parent=1 // loop_footer
      %s25 = sadd.s32 1, %s21
    $region7: #{tpu_custom_call.1} parent=1 // loop_footer_branch
      %20 = sbr.rel target = $region3
    $region8: #{tpu_custom_call.1} parent=1 // loop_exit
      _
    %452 = vsyncpa [#allocation4], 1
    %s453 = scalar_lea.sflag [#allocation4], 1
    %454 = vsyncpa %s453, 1
    %455 = vsyncpa [#allocation5], 1
    %s456 = scalar_lea.sflag [#allocation5], 1
    %457 = vsyncpa %s456, 1
    %458 = vsyncpa [#allocation8], 1
    %s459 = scalar_lea.sflag [#allocation8], 1
    %460 = vsyncpa %s459, 1

</llo_original>
